<compile_context>
chip_gen: v7x
topology: tpu7x:2x2x1
jax: 0.10.0
libtpu: 0.0.40
codegen_flags: <defaults>
</compile_context>

<pallas_src>
import functools

import jax
import jax.numpy as jnp
import numpy as np
from jax.experimental import pallas as pl
from jax.experimental.pallas import tpu as pltpu

# ----------------------------- config (synthetic) -----------------------------
HIDDEN_DIM = 32
N_DIM = 2 * HIDDEN_DIM          # attention feature width (2H) for this branch
BATCH = 2
SEQ_LEN = 8

_LANE = 128                     # vreg lane count


def _round_up(x, m):
    return ((x + m - 1) // m) * m


# ----------------------------- fused attention kernel -------------------------
def _attention_kernel(s_t_ref, enc_out_ref, enc_feat_ref, mc_ref, p_ref, out_ref,
                      *, T, N):
    """Whole Attention.forward in one invocation (everything VMEM-resident).

    Shapes:
      s_t_ref      [B, N]        enc_out_ref  [B, T, N]    enc_feat_ref [B, T, N]
      mc_ref       [2B, T]       rows 0:B  = enc_padding_mask, rows B:2B = coverage
      p_ref        [N+3, N]      rows 0:N = w_dec (pre-transposed), N = b_dec,
                                 N+1 = v, N+2 = w_c
      out_ref      [B, 128]      lanes: [ c_t(N) | attn(T) | coverage(T) | junk ]
    """
    B = s_t_ref.shape[0]

    # --- unpack the single parameter slab (one DMA for all weights) ----------
    w_dec = p_ref[0:N, :]                        # [N, N]   y = x @ w_dec
    aux = p_ref[N:N + 3, :]                      # [3, N]
    b_dec = aux[0:1, :]                          # [1, N]
    v_row = aux[1:2, :]                          # [1, N]
    w_c = aux[2:3, :]                            # [1, N]

    # --- unpack mask / coverage (packed into one DMA) -------------------------
    mc = mc_ref[...]                             # [2B, T]
    mask = mc[:B, :]
    cov = mc[B:, :]

    # decode_proj(s_t_hat): single MXU pass + bias
    dec_fea = jnp.dot(s_t_ref[...], w_dec,
                      preferred_element_type=jnp.float32) + b_dec   # [B, N]

    # att_features = encoder_feature + dec_fea (broadcast over T)
    #                + coverage * W_c_row   (coverage input is zero when disabled)
    att = (enc_feat_ref[...]
           + dec_fea[:, None, :]
           + cov[:, :, None] * w_c[None, :, :])                     # [B, T, N]
    e = jnp.tanh(att)                                               # EUP

    # scores = v(e): feature-axis contraction on the MXU (pattern 'bqd,bkd->bqk'
    # with k=1); the trailing unit axis is collapsed with an exact size-1 reduce.
    v_b = jnp.broadcast_to(v_row[None, :, :], (B, 1, N))
    scores = jnp.sum(
        jnp.einsum('btn,bkn->btk', e, v_b, preferred_element_type=jnp.float32),
        axis=-1)                                                    # [B, T]

    # softmax over T, masked, renormalized — exactly as in the PyTorch code, but
    # the softmax denominator cancels against the renormalization, so a single
    # EUP approx-reciprocal replaces both divides:
    #   attn = exp(s - max) * mask / sum(exp(s - max) * mask)
    # (max is taken over ALL columns, masked included, matching the reference.)
    m = jnp.max(scores, axis=-1, keepdims=True)
    p = jnp.exp(scores - m) * mask
    attn = p * pl.reciprocal(jnp.sum(p, axis=-1, keepdims=True), approx=True)

    # context vector on the MXU (pattern 'bqk,bkd->bqd' with q=1)
    c_t = jnp.sum(
        jnp.einsum('bqt,btn->bqn', attn[:, None, :], enc_out_ref[...],
                   preferred_element_type=jnp.float32),
        axis=1)                                                     # [B, N]

    cov_new = cov + attn                                            # [B, T]

    # single lane-dense output slab -> one output DMA; three sliced stores.
    # Lanes beyond N + 2T stay uninitialized; the wrapper slices them off.
    out_ref[:, 0:N] = c_t
    out_ref[:, N:N + T] = attn
    out_ref[:, N + T:N + 2 * T] = cov_new


# ----------------------------- wrapper -----------------------------------------
def attention_forward(param_slab, s_t_hat, encoder_outputs, encoder_feature,
                      enc_padding_mask, coverage=None, *, is_coverage=True):
    """Returns (c_t [B, N], attn_dist [B, T], coverage [B, T] or passthrough)."""
    B, T, N = encoder_outputs.shape
    out_w = max(_round_up(N + 2 * T, _LANE), _LANE)

    cov_in = (coverage if (is_coverage and coverage is not None)
              else jnp.zeros((B, T), jnp.float32))

    # mask + coverage packed along the batch axis: one DMA instead of two.
    mask_cov = jnp.concatenate(
        [enc_padding_mask.astype(jnp.float32), cov_in.astype(jnp.float32)], axis=0)

    enc_feat = encoder_feature.reshape(B, T, N).astype(jnp.float32)

    slab = pl.pallas_call(
        functools.partial(_attention_kernel, T=T, N=N),
        out_shape=jax.ShapeDtypeStruct((B, out_w), jnp.float32),
        in_specs=[pl.BlockSpec(memory_space=pltpu.MemorySpace.VMEM)] * 5,
        out_specs=pl.BlockSpec(memory_space=pltpu.MemorySpace.VMEM),
    )(s_t_hat.astype(jnp.float32), encoder_outputs.astype(jnp.float32),
      enc_feat, mask_cov, param_slab)

    c_t = slab[:, :N]
    attn_dist = slab[:, N:N + T]
    coverage_out = slab[:, N + T:N + 2 * T] if is_coverage else coverage
    return c_t, attn_dist, coverage_out


# ----------------------------- parameter init ----------------------------------
def init_params(key, n=N_DIM):
    k1, k2, k3, k4 = jax.random.split(key, 4)
    # decode_proj: Linear(n, n) — stored pre-transposed so y = x @ w_dec + b_dec
    w_dec = 0.1 * jax.random.normal(k1, (n, n), jnp.float32)
    b_dec = 0.1 * jax.random.normal(k2, (1, n), jnp.float32)
    # v: Linear(n, 1, bias=False) — stored as a row vector
    v = 0.1 * jax.random.normal(k3, (1, n), jnp.float32)
    # W_c: Linear(1, n, bias=False) — weight [n, 1], stored transposed as [1, n]
    w_c = 0.1 * jax.random.normal(k4, (1, n), jnp.float32)
    return dict(w_dec=w_dec, b_dec=b_dec, v=v, w_c=w_c)


def pack_params(params):
    """Pack all weights into ONE [N+3, N] slab (single input DMA), done once."""
    return jnp.concatenate(
        [params["w_dec"], params["b_dec"], params["v"], params["w_c"]],
        axis=0).astype(jnp.float32)


# ----------------------------- pure-JAX reference -------------------------------
def attention_ref(params, s_t_hat, encoder_outputs, encoder_feature,
                  enc_padding_mask, coverage=None, *, is_coverage=True):
    B, T, N = encoder_outputs.shape
    dec_fea = s_t_hat @ params["w_dec"] + params["b_dec"]
    dec_exp = jnp.broadcast_to(dec_fea[:, None, :], (B, T, N)).reshape(-1, N)
    att = encoder_feature + dec_exp
    if is_coverage:
        att = att + coverage.reshape(-1, 1) * params["w_c"]
    e = jnp.tanh(att)
    scores = (e * params["v"]).sum(-1).reshape(B, T)
    attn_ = jax.nn.softmax(scores, axis=1) * enc_padding_mask
    attn = attn_ / attn_.sum(1, keepdims=True)
    c_t = jnp.einsum('bt,btn->bn', attn, encoder_outputs)
    cov_out = coverage + attn if is_coverage else coverage
    return c_t, attn, cov_out


# ----------------------------- main ---------------------------------------------
if __name__ == "__main__":
    key = jax.random.PRNGKey(0)
    kp, k1, k2, k3, k4 = jax.random.split(key, 5)
    params = init_params(kp)
    param_slab = pack_params(params)

    B, T, N = BATCH, SEQ_LEN, N_DIM
    s_t_hat = jax.random.normal(k1, (B, N), jnp.float32)          # decoder state
    encoder_outputs = jax.random.normal(k2, (B, T, N), jnp.float32)
    encoder_feature = jax.random.normal(k3, (B * T, N), jnp.float32)
    enc_padding_mask = jnp.ones((B, T), jnp.float32).at[:, -2:].set(0.0)
    coverage = jax.random.uniform(k4, (B, T), jnp.float32, 0.0, 1.0)

    # Tolerance: pl.reciprocal(approx=True) replaces the exact divides, so allow
    # a slightly looser (but still tight) match against the exact-divide reference.
    RTOL = ATOL = 2e-3

    # --- coverage branch (config.is_coverage == True) ---
    c_t, attn, cov_out = attention_forward(
        param_slab, s_t_hat, encoder_outputs, encoder_feature,
        enc_padding_mask, coverage, is_coverage=True)
    jax.block_until_ready((c_t, attn, cov_out))

    c_exp, a_exp, cov_exp = attention_ref(
        params, s_t_hat, encoder_outputs, encoder_feature,
        enc_padding_mask, coverage, is_coverage=True)
    np.testing.assert_allclose(np.asarray(c_t), np.asarray(c_exp), rtol=RTOL, atol=ATOL)
    np.testing.assert_allclose(np.asarray(attn), np.asarray(a_exp), rtol=RTOL, atol=ATOL)
    np.testing.assert_allclose(np.asarray(cov_out), np.asarray(cov_exp), rtol=RTOL, atol=ATOL)

    # --- no-coverage branch (config.is_coverage == False) ---
    c_t2, attn2, cov2 = attention_forward(
        param_slab, s_t_hat, encoder_outputs, encoder_feature,
        enc_padding_mask, None, is_coverage=False)
    jax.block_until_ready((c_t2, attn2))
    c_exp2, a_exp2, _ = attention_ref(
        params, s_t_hat, encoder_outputs, encoder_feature,
        enc_padding_mask, None, is_coverage=False)
    np.testing.assert_allclose(np.asarray(c_t2), np.asarray(c_exp2), rtol=RTOL, atol=ATOL)
    np.testing.assert_allclose(np.asarray(attn2), np.asarray(a_exp2), rtol=RTOL, atol=ATOL)
    assert cov2 is None

    assert c_t.shape == (B, N)
    assert attn.shape == (B, T)
    assert cov_out.shape == (B, T)
    print("KERNEL_OK")
</pallas_src>

<mosaic_0001>
module attributes {stable_mosaic.version = 11 : i64} {
  func.func @_attention_kernel(%arg0: memref<2x64xf32, #tpu.memory_space<vmem>>, %arg1: memref<2x8x64xf32, #tpu.memory_space<vmem>>, %arg2: memref<2x8x64xf32, #tpu.memory_space<vmem>>, %arg3: memref<4x8xf32, #tpu.memory_space<vmem>>, %arg4: memref<67x64xf32, #tpu.memory_space<vmem>>, %arg5: memref<2x128xf32, #tpu.memory_space<vmem>>) attributes {dimension_semantics = [], scalar_prefetch = 0 : i64, scratch_operands = 0 : i64, tpu.core_type = #tpu.core_type<tc>} {
    %c0 = arith.constant 0 : index
    %c0_0 = arith.constant 0 : index
    %0 = vector.load %arg4[%c0, %c0_0] : memref<67x64xf32, #tpu.memory_space<vmem>>, vector<64x64xf32>
    %c64 = arith.constant 64 : index
    %c0_1 = arith.constant 0 : index
    %1 = vector.load %arg4[%c64, %c0_1] : memref<67x64xf32, #tpu.memory_space<vmem>>, vector<3x64xf32>
    %2 = vector.extract_strided_slice %1 {offsets = [0, 0], sizes = [1, 64], strides = [1, 1]} : vector<3x64xf32> to vector<1x64xf32>
    %3 = vector.extract_strided_slice %1 {offsets = [1, 0], sizes = [1, 64], strides = [1, 1]} : vector<3x64xf32> to vector<1x64xf32>
    %4 = vector.extract_strided_slice %1 {offsets = [2, 0], sizes = [1, 64], strides = [1, 1]} : vector<3x64xf32> to vector<1x64xf32>
    %c0_2 = arith.constant 0 : index
    %c0_3 = arith.constant 0 : index
    %5 = vector.load %arg3[%c0_2, %c0_3] : memref<4x8xf32, #tpu.memory_space<vmem>>, vector<4x8xf32>
    %6 = vector.extract_strided_slice %5 {offsets = [0, 0], sizes = [2, 8], strides = [1, 1]} : vector<4x8xf32> to vector<2x8xf32>
    %7 = vector.extract_strided_slice %5 {offsets = [2, 0], sizes = [2, 8], strides = [1, 1]} : vector<4x8xf32> to vector<2x8xf32>
    %c0_4 = arith.constant 0 : index
    %c0_5 = arith.constant 0 : index
    %8 = vector.load %arg0[%c0_4, %c0_5] : memref<2x64xf32, #tpu.memory_space<vmem>>, vector<2x64xf32>
    %cst = arith.constant dense<0.000000e+00> : vector<2x64xf32>
    %9 = tpu.matmul %8, %0, %cst {dimension_numbers = #tpu.dot_dimension_numbers<[1], [0], [0], [1], [0, 0, 1, 1], [], []>} : vector<2x64xf32>, vector<64x64xf32>, vector<2x64xf32> -> vector<2x64xf32>
    %10 = vector.broadcast %2 : vector<1x64xf32> to vector<2x64xf32>
    %11 = arith.addf %9, %10 : vector<2x64xf32>
    %c0_6 = arith.constant 0 : index
    %c0_7 = arith.constant 0 : index
    %c0_8 = arith.constant 0 : index
    %12 = vector.load %arg2[%c0_6, %c0_7, %c0_8] : memref<2x8x64xf32, #tpu.memory_space<vmem>>, vector<2x8x64xf32>
    %13 = vector.shape_cast %11 : vector<2x64xf32> to vector<2x1x64xf32>
    %14 = vector.broadcast %13 : vector<2x1x64xf32> to vector<2x8x64xf32>
    %15 = arith.addf %12, %14 : vector<2x8x64xf32>
    %16 = vector.shape_cast %7 : vector<2x8xf32> to vector<2x8x1xf32>
    %17 = vector.shape_cast %4 : vector<1x64xf32> to vector<1x1x64xf32>
    %18 = vector.broadcast %16 : vector<2x8x1xf32> to vector<2x8x64xf32>
    %19 = vector.broadcast %17 : vector<1x1x64xf32> to vector<2x8x64xf32>
    %20 = arith.mulf %18, %19 : vector<2x8x64xf32>
    %21 = arith.addf %15, %20 : vector<2x8x64xf32>
    %22 = math.tanh %21 : vector<2x8x64xf32>
    %23 = vector.shape_cast %3 : vector<1x64xf32> to vector<1x1x64xf32>
    %24 = vector.shape_cast %23 : vector<1x1x64xf32> to vector<1x1x64xf32>
    %25 = vector.broadcast %24 : vector<1x1x64xf32> to vector<2x1x64xf32>
    "tpu.trace_start"() <{level = 10 : i32, message = "btn,bkn->btk"}> : () -> ()
    %cst_9 = arith.constant dense<0.000000e+00> : vector<2x8x1xf32>
    %26 = tpu.matmul %22, %25, %cst_9 {dimension_numbers = #tpu.dot_dimension_numbers<[2], [2], [1], [1], [0, 0, 0, 1, 1, 1], [0], [0]>} : vector<2x8x64xf32>, vector<2x1x64xf32>, vector<2x8x1xf32> -> vector<2x8x1xf32>
    "tpu.trace_stop"() : () -> ()
    %cst_10 = arith.constant dense<0.000000e+00> : vector<2x8xf32>
    %27 = vector.multi_reduction <add>, %26, %cst_10 [2] : vector<2x8x1xf32> to vector<2x8xf32>
    %cst_11 = arith.constant dense<0xFF800000> : vector<2xf32>
    %28 = vector.multi_reduction <maximumf>, %27, %cst_11 [1] : vector<2x8xf32> to vector<2xf32>
    %29 = vector.shape_cast %28 : vector<2xf32> to vector<2x1xf32>
    %30 = vector.broadcast %29 : vector<2x1xf32> to vector<2x8xf32>
    %31 = arith.subf %27, %30 : vector<2x8xf32>
    %32 = math.exp %31 : vector<2x8xf32>
    %33 = arith.mulf %32, %6 : vector<2x8xf32>
    %cst_12 = arith.constant dense<0.000000e+00> : vector<2xf32>
    %34 = vector.multi_reduction <add>, %33, %cst_12 [1] : vector<2x8xf32> to vector<2xf32>
    %35 = vector.shape_cast %34 : vector<2xf32> to vector<2x1xf32>
    %36 = tpu.reciprocal %35 {approx = true} : vector<2x1xf32> -> vector<2x1xf32>
    %37 = vector.broadcast %36 : vector<2x1xf32> to vector<2x8xf32>
    %38 = arith.mulf %33, %37 : vector<2x8xf32>
    %39 = vector.shape_cast %38 : vector<2x8xf32> to vector<2x1x8xf32>
    %c0_13 = arith.constant 0 : index
    %c0_14 = arith.constant 0 : index
    %c0_15 = arith.constant 0 : index
    %40 = vector.load %arg1[%c0_13, %c0_14, %c0_15] : memref<2x8x64xf32, #tpu.memory_space<vmem>>, vector<2x8x64xf32>
    "tpu.trace_start"() <{level = 10 : i32, message = "bqt,btn->bqn"}> : () -> ()
    %cst_16 = arith.constant dense<0.000000e+00> : vector<2x1x64xf32>
    %41 = tpu.matmul %39, %40, %cst_16 {dimension_numbers = #tpu.dot_dimension_numbers<[2], [1], [1], [2], [0, 0, 0, 1, 1, 2], [0], [0]>} : vector<2x1x8xf32>, vector<2x8x64xf32>, vector<2x1x64xf32> -> vector<2x1x64xf32>
    "tpu.trace_stop"() : () -> ()
    %cst_17 = arith.constant dense<0.000000e+00> : vector<2x64xf32>
    %42 = vector.multi_reduction <add>, %41, %cst_17 [1] : vector<2x1x64xf32> to vector<2x64xf32>
    %43 = arith.addf %7, %38 : vector<2x8xf32>
    %c0_18 = arith.constant 0 : index
    %c0_19 = arith.constant 0 : index
    %44 = vector.load %arg5[%c0_18, %c0_19] : memref<2x128xf32, #tpu.memory_space<vmem>>, vector<2x64xf32>
    tpu.vector_store %arg5[%c0_18, %c0_19], %42 {strides = array<i32>} : memref<2x128xf32, #tpu.memory_space<vmem>>, vector<2x64xf32>,
    %c0_20 = arith.constant 0 : index
    %c64_21 = arith.constant 64 : index
    %45 = vector.load %arg5[%c0_20, %c64_21] : memref<2x128xf32, #tpu.memory_space<vmem>>, vector<2x8xf32>
    tpu.vector_store %arg5[%c0_20, %c64_21], %38 {strides = array<i32>} : memref<2x128xf32, #tpu.memory_space<vmem>>, vector<2x8xf32>,
    %c0_22 = arith.constant 0 : index
    %c72 = arith.constant 72 : index
    %46 = vector.load %arg5[%c0_22, %c72] : memref<2x128xf32, #tpu.memory_space<vmem>>, vector<2x8xf32>
    tpu.vector_store %arg5[%c0_22, %c72], %43 {strides = array<i32>} : memref<2x128xf32, #tpu.memory_space<vmem>>, vector<2x8xf32>,
    return
  }
}

</mosaic_0001>

<llo_original>
// kernel: tpu_custom_call.1
$region0: #{tpu_custom_call.1}
  #allocation0 [shape = 'u32[]', space=smem, size = 0x4, offset = 0x4, fixed_abs, tag = 'smem constant byte address 0x4 - core index']
  #allocation1 [shape = 'u32[144,128]{1,0:T(1,128)}', space=vmem, size = 0x12000, scoped, tag = 'internal scratch']
  %s0 = inlined_call_operand.vmem [shape: f32[2,64], index: 0, kind: input, shape index: {}]
  %s1 = inlined_call_operand.vmem [shape: f32[2,8,64], index: 1, kind: input, shape index: {}]
  %s2 = inlined_call_operand.vmem [shape: f32[2,8,64], index: 2, kind: input, shape index: {}]
  %s3 = inlined_call_operand.vmem [shape: f32[4,8], index: 3, kind: input, shape index: {}]
  %s4 = inlined_call_operand.vmem [shape: f32[67,64], index: 4, kind: input, shape index: {}]
  %s5 = inlined_call_operand.hbm [shape: f32[2,128], index: 5, kind: output, shape index: {}]
  %s6 = sld [smem:[#allocation0]]
  $region30: #{tpu_custom_call.1} parent=0
    _
  %s8 = ssub.s32 1, %s6
  %s9 = scalar_select 0, %s8, %s6
  $region1: #{tpu_custom_call.1} parent=0
    #allocation2 [shape = 'u8[1024]{0}', space=vmem, size = 0x400, scoped, tag = 'output window, operand 0, single buffered']
    #allocation3 [shape = 's32[1]{0}', space=sflag, size = 0x4, scoped, tag = 'scoped memory for tpu_custom_call.1']
    %10 = vsyncpa [#allocation3], 0
    // Predicated region
    $region2: #{tpu_custom_call.1} parent=1 // pred_check
      _
    $region3: #{tpu_custom_call.1} parent=1 // pred_check_branch
      %12 = sbr.rel (0) target = $region5
    $region4: #{tpu_custom_call.1} parent=1 // pred_region
      _
    $region5: #{tpu_custom_call.1} parent=1 // pred_fallthru
      _
    // Predicated region
    $region6: #{tpu_custom_call.1} parent=1 // pred_check
      _
    $region7: #{tpu_custom_call.1} parent=1 // pred_check_branch
      %14 = sbr.rel (0) target = $region9
    $region8: #{tpu_custom_call.1} parent=1 // pred_region
      _
    $region9: #{tpu_custom_call.1} parent=1 // pred_fallthru
      _
    // Predicated region
    $region10: #{tpu_custom_call.1} parent=1 // pred_check
      _
    $region11: #{tpu_custom_call.1} parent=1 // pred_check_branch
      %16 = sbr.rel (0) target = $region13
    $region12: #{tpu_custom_call.1} parent=1 // pred_region
      _
    $region13: #{tpu_custom_call.1} parent=1 // pred_fallthru
      _
    // Predicated region
    $region14: #{tpu_custom_call.1} parent=1 // pred_check
      _
    $region15: #{tpu_custom_call.1} parent=1 // pred_check_branch
      %18 = sbr.rel (0) target = $region17
    $region16: #{tpu_custom_call.1} parent=1 // pred_region
      _
    $region17: #{tpu_custom_call.1} parent=1 // pred_fallthru
      _
    // Predicated region
    $region18: #{tpu_custom_call.1} parent=1 // pred_check
      _
    $region19: #{tpu_custom_call.1} parent=1 // pred_check_branch
      %20 = sbr.rel (0) target = $region21
    $region20: #{tpu_custom_call.1} parent=1 // pred_region
      _
    $region21: #{tpu_custom_call.1} parent=1 // pred_fallthru
      _
    %v21 = vld [vmem:[%s4] sm:$0xff]
    %v22 = vld [vmem:[%s4 + $0x8] sm:$0xff]
    %v23 = vld [vmem:[%s4 + $0x10] sm:$0xff]
    %v24 = vld [vmem:[%s4 + $0x18] sm:$0xff]
    %v25 = vld [vmem:[%s4 + $0x20] sm:$0xff]
    %v26 = vld [vmem:[%s4 + $0x28] sm:$0xff]
    %v27 = vld [vmem:[%s4 + $0x30] sm:$0xff]
    %v28 = vld [vmem:[%s4 + $0x38] sm:$0xff]
    %v29 = vld [vmem:[%s4 + $0x40] sm:$0x7]
    %v30 = vld [vmem:[%s3] sm:$0xf]
    %v31 = vld [vmem:[%s0] sm:$0x3]
    %v32 = vlaneseq
    %v33 = vshrl.u32 %v32, 7
    %v34 = vsub.s32 0, %v33
    %v35 = vrot.slane %v29, %v34
    %vm36 = vcmask 523264
    %v38 = vsel %vm36, %v31, 0
    %40 = vmatprep.subr.mxu0 0.0
    %41 = vmatpush1.msra.mxu0 %v21
    %42 = vmatprep.subr.mxu0 0.0
    %43 = vmatpush1.msra.mxu0 %v22
    %44 = vmatprep.subr.mxu0 0.0
    %45 = vmatpush1.msra.mxu0 %v23
    %46 = vmatprep.subr.mxu0 0.0
    %47 = vmatpush1.msra.mxu0 %v24
    %48 = vmatprep.subr.mxu0 0.0
    %49 = vmatpush1.msra.mxu0 %v25
    %50 = vmatprep.subr.mxu0 0.0
    %51 = vmatpush1.msra.mxu0 %v26
    %52 = vmatprep.subr.mxu0 0.0
    %53 = vmatpush1.msra.mxu0 %v27
    %54 = vmatprep.subr.mxu0 0.0
    %55 = vmatpush1.msra.mxu0 %v28
    %56 = vmatprep.subr.mxu0 0.0
    %57 = vmatpush1.msra.mxu0 0.0
    %58 = vmatprep.subr.mxu0 0.0
    %59 = vmatpush1.msra.mxu0 0.0
    %60 = vmatprep.subr.mxu0 0.0
    %61 = vmatpush1.msra.mxu0 0.0
    %62 = vmatprep.subr.mxu0 0.0
    %63 = vmatpush1.msra.mxu0 0.0
    %64 = vmatprep.subr.mxu0 0.0
    %65 = vmatpush1.msra.mxu0 0.0
    %66 = vmatprep.subr.mxu0 0.0
    %67 = vmatpush1.msra.mxu0 0.0
    %68 = vmatprep.subr.mxu0 0.0
    %69 = vmatpush1.msra.mxu0 0.0
    %70 = vmatprep.subr.mxu0 0.0
    %71 = vmatpush1.msra.mxu0 0.0
    %72 = vmatprep.subr.mxu0 0.0
    %73 = vmatpush1.msra.mxu0 0.0
    %74 = vmatprep.subr.mxu0 0.0
    %75 = vmatpush1.msra.mxu0 0.0
    %76 = vmatprep.subr.mxu0 0.0
    %77 = vmatpush1.msra.mxu0 0.0
    %78 = vmatprep.subr.mxu0 0.0
    %79 = vmatpush1.msra.mxu0 0.0
    %80 = vmatprep.subr.mxu0 0.0
    %81 = vmatpush1.msra.mxu0 0.0
    %82 = vmatprep.subr.mxu0 0.0
    %83 = vmatpush1.msra.mxu0 0.0
    %84 = vmatprep.subr.mxu0 0.0
    %85 = vmatpush1.msra.mxu0 0.0
    %86 = vmatprep.subr.mxu0 0.0
    %87 = vmatpush1.msra.mxu0 0.0
    %88 = vmatprep.subr.mxu0 0.0
    %89 = vmatpush1.msra.mxu0 0.0
    %90 = vmatprep.subr.mxu0 0.0
    %91 = vmatpush1.msra.mxu0 0.0
    %92 = vmatprep.subr.mxu0 0.0
    %93 = vmatpush1.msra.mxu0 0.0
    %94 = vmatprep.subr.mxu0 0.0
    %95 = vmatpush1.msra.mxu0 0.0
    %96 = vmatprep.subr.mxu0 0.0
    %97 = vmatpush1.msra.mxu0 0.0
    %98 = vmatprep.subr.mxu0 0.0
    %99 = vmatpush1.msra.mxu0 0.0
    %100 = vmatprep.subr.mxu0 0.0
    %101 = vmatpush1.msra.mxu0 0.0
    %102 = vmatprep.subr.mxu0 0.0
    %103 = vmatpush1.msra.mxu0 0.0
    %104 = vmatprep.mubr.f32.mxu0 0.0
    %105 = vmatmul.mubr.f32.gmra.mrb[0].mxu0 %v38
    %v106 = vpop.f32.mrb[0].mxu0
    %v107 = vadd.f32 %v35, %v106
    %v108 = vpop.f32.mrb[0].mxu0
    %109 = vdwg.mxu0
    %v110 = vld [vmem:[%s2] sm:$0xff]
    %v111 = vld [vmem:[%s2 + $0x8] sm:$0xff]
    %v114 = vunpack.c.l.s4 1966171168
    %v115 = vunpack.c.0.s8 %v114
    %v116 = vlaneseq
    %v117 = vshrl.u32 %v116, 7
    %v118 = vsub.s32 %v115, %v117
    %v119 = vrot.slane %v107, %v118
    %v120 = vcombine.high %v119, %v119
    %v122 = vunpack.c.l.s4 1966171168
    %v123 = vunpack.c.0.s8 %v122
    %v124 = vlaneseq
    %v125 = vshrl.u32 %v124, 7
    %v126 = vsub.s32 %v123, %v125
    %v127 = vrot.slane %v119, %v126
    %v129 = vunpack.c.l.s4 1966171168
    %v130 = vunpack.c.0.s8 %v129
    %v131 = vlaneseq
    %v132 = vshrl.u32 %v131, 7
    %v133 = vsub.s32 %v130, %v132
    %v134 = vrot.slane %v120, %v133
    %v135 = vlaneseq
    %v136 = vshrl.u32 %v135, 7
    %v137 = vsub.s32 0, %v136
    %v138 = vrot.slane %v127, %v137
    %v139 = vlaneseq
    %v140 = vshrl.u32 %v139, 7
    %v141 = vsub.s32 0, %v140
    %v142 = vrot.slane %v134, %v141
    %v145 = vadd.f32 %v110, %v138
    %v146 = vadd.f32 %v111, %v142
    %v147 = vlaneseq
    %v148 = vshrl.u32 %v147, 7
    %v149 = vsub.s32 2, %v148
    %v150 = vrot.slane %v30, %v149
    %152 = vbcast.lane.b32.xlu0 %v150, 256
    %v153 = vpop.permute.xlu0 %152
    %v154 = vlaneseq
    %v155 = vshrl.u32 %v154, 7
    %v156 = vsub.s32 3, %v155
    %v157 = vrot.slane %v30, %v156
    %159 = vbcast.lane.b32.xlu0 %v157, 256
    %v160 = vpop.permute.xlu0 %159
    %v161 = vlaneseq
    %v162 = vshrl.u32 %v161, 7
    %v163 = vsub.s32 2, %v162
    %v164 = vrot.slane %v29, %v163
    %v165 = vmul.f32 %v153, %v164
    %v166 = vmul.f32 %v160, %v164
    %v167 = vadd.f32 %v145, %v165
    %v168 = vadd.f32 %v146, %v166
    %v169 = vtanh.pop %v167
    %v170 = vtanh.pop %v168
    %v171 = vlaneseq
    %v172 = vshrl.u32 %v171, 7
    %v173 = vsub.s32 1, %v172
    %v174 = vrot.slane %v29, %v173
    %v175 = vmul.f32 %v169, %v174
    %v176 = vsel %vm36, %v175, 0.0
    %177 = vadd.xlane.f32.xlu0 %v176
    %v178 = vpop.xlane.xlu0 %177
    %v179 = vmul.f32 %v170, %v174
    %v180 = vsel %vm36, %v179, 0.0
    %181 = vadd.xlane.f32.xlu0 %v180
    %v182 = vpop.xlane.xlu0 %181
    %v183 = vadd.f32 %v178, 0.0
    %v184 = vadd.f32 %v182, 0.0
    %187 = vset.pattern.permute.xlu0 0
    %188 = vperm.xlu0 %187, %v183
    %v189 = vpop.permute.xlu0 %188
    %190 = vset.pattern.permute.xlu0 0
    %191 = vperm.xlu0 %190, %v184
    %v192 = vpop.permute.xlu0 %191
    %v193 = vlaneseq
    %v194 = vand.u32 %v193, 127
    %v195 = vlaneseq
    %v196 = vshrl.u32 %v195, 7
    %v197 = vsub.s32 %v194, %v196
    %v198 = vrot.slane %v189, %v197
    %v199 = vlaneseq
    %v200 = vshrl.u32 %v199, 7
    %v201 = vsub.s32 %v194, %v200
    %v202 = vrot.slane %v192, %v201
    %vm203 = vcmask 1041409
    %v204 = vsel %vm203, %v202, %v198
    %vm206 = vcmask 58368
    %v207 = vsel %vm206, %v204, -inf
    %208 = vmax.xlane.f32.xlu0 %v207
    %v209 = vpop.xlane.xlu0 %208
    %v211 = vlaneseq
    %v212 = vshrl.u32 %v211, 7
    %v213 = vsub.s32 0, %v212
    %v214 = vrot.slane %v209, %v213
    %v215 = vlaneseq
    %v216 = vshrl.u32 %v215, 7
    %v217 = vsub.s32 1, %v216
    %v218 = vrot.slane %v209, %v217
    %v221 = vsub.f32 %v183, %v214
    %v222 = vsub.f32 %v184, %v218
    %v223 = vmul.f32 %v221, 1.442695
    %v224 = vpow.pop %v223
    %v225 = vmul.f32 %v222, 1.442695
    %v226 = vpow.pop %v225
    %v228 = vlaneseq
    %v229 = vshrl.u32 %v228, 7
    %v230 = vsub.s32 0, %v229
    %v231 = vrot.slane %v30, %v230
    %233 = vbcast.lane.b32.xlu0 %v231, 256
    %v234 = vpop.permute.xlu0 %233
    %v235 = vlaneseq
    %v236 = vshrl.u32 %v235, 7
    %v237 = vsub.s32 1, %v236
    %v238 = vrot.slane %v30, %v237
    %240 = vbcast.lane.b32.xlu0 %v238, 256
    %v241 = vpop.permute.xlu0 %240
    %v244 = vmul.f32 %v224, %v234
    %v245 = vmul.f32 %v226, %v241
    %248 = vset.pattern.permute.xlu0 0
    %249 = vperm.xlu0 %248, %v244
    %v250 = vpop.permute.xlu0 %249
    %251 = vset.pattern.permute.xlu0 0
    %252 = vperm.xlu0 %251, %v245
    %v253 = vpop.permute.xlu0 %252
    %v254 = vlaneseq
    %v255 = vshrl.u32 %v254, 7
    %v256 = vsub.s32 %v194, %v255
    %v257 = vrot.slane %v250, %v256
    %v258 = vlaneseq
    %v259 = vshrl.u32 %v258, 7
    %v260 = vsub.s32 %v194, %v259
    %v261 = vrot.slane %v253, %v260
    %v262 = vsel %vm203, %v261, %v257
    %v264 = vsel %vm206, %v262, 0.0
    %265 = vadd.xlane.f32.xlu0 %v264
    %v266 = vpop.xlane.xlu0 %265
    %v267 = vrcp.pop %v266
    %v269 = vlaneseq
    %v270 = vshrl.u32 %v269, 7
    %v271 = vsub.s32 0, %v270
    %v272 = vrot.slane %v267, %v271
    %v273 = vlaneseq
    %v274 = vshrl.u32 %v273, 7
    %v275 = vsub.s32 1, %v274
    %v276 = vrot.slane %v267, %v275
    %v279 = vmul.f32 %v244, %v272
    %v280 = vmul.f32 %v245, %v276
    %v281 = vld [vmem:[%s1] sm:$0xff]
    %v282 = vld [vmem:[%s1 + $0x8] sm:$0xff]
    %284 = vset.pattern.permute.xlu0 0
    %285 = vperm.xlu0 %284, %v279
    %v286 = vpop.permute.xlu0 %285
    %v287 = vlaneseq
    %v288 = vshrl.u32 %v287, 7
    %v289 = vsub.s32 %v194, %v288
    %v290 = vrot.slane %v286, %v289
    %vm291 = vcmask 64512
    %v292 = vsel %vm291, %v290, 0
    %294 = vmatprep.subr.mxu0 0.0
    %295 = vmatpush1.msra.mxu0 %v281
    %296 = vmatprep.subr.mxu0 0.0
    %297 = vmatpush1.msra.mxu0 0.0
    %298 = vmatprep.subr.mxu0 0.0
    %299 = vmatpush1.msra.mxu0 0.0
    %300 = vmatprep.subr.mxu0 0.0
    %301 = vmatpush1.msra.mxu0 0.0
    %302 = vmatprep.subr.mxu0 0.0
    %303 = vmatpush1.msra.mxu0 0.0
    %304 = vmatprep.subr.mxu0 0.0
    %305 = vmatpush1.msra.mxu0 0.0
    %306 = vmatprep.subr.mxu0 0.0
    %307 = vmatpush1.msra.mxu0 0.0
    %308 = vmatprep.subr.mxu0 0.0
    %309 = vmatpush1.msra.mxu0 0.0
    %310 = vmatprep.subr.mxu0 0.0
    %311 = vmatpush1.msra.mxu0 0.0
    %312 = vmatprep.subr.mxu0 0.0
    %313 = vmatpush1.msra.mxu0 0.0
    %314 = vmatprep.subr.mxu0 0.0
    %315 = vmatpush1.msra.mxu0 0.0
    %316 = vmatprep.subr.mxu0 0.0
    %317 = vmatpush1.msra.mxu0 0.0
    %318 = vmatprep.subr.mxu0 0.0
    %319 = vmatpush1.msra.mxu0 0.0
    %320 = vmatprep.subr.mxu0 0.0
    %321 = vmatpush1.msra.mxu0 0.0
    %322 = vmatprep.subr.mxu0 0.0
    %323 = vmatpush1.msra.mxu0 0.0
    %324 = vmatprep.subr.mxu0 0.0
    %325 = vmatpush1.msra.mxu0 0.0
    %326 = vmatprep.subr.mxu0 0.0
    %327 = vmatpush1.msra.mxu0 0.0
    %328 = vmatprep.subr.mxu0 0.0
    %329 = vmatpush1.msra.mxu0 0.0
    %330 = vmatprep.subr.mxu0 0.0
    %331 = vmatpush1.msra.mxu0 0.0
    %332 = vmatprep.subr.mxu0 0.0
    %333 = vmatpush1.msra.mxu0 0.0
    %334 = vmatprep.subr.mxu0 0.0
    %335 = vmatpush1.msra.mxu0 0.0
    %336 = vmatprep.subr.mxu0 0.0
    %337 = vmatpush1.msra.mxu0 0.0
    %338 = vmatprep.subr.mxu0 0.0
    %339 = vmatpush1.msra.mxu0 0.0
    %340 = vmatprep.subr.mxu0 0.0
    %341 = vmatpush1.msra.mxu0 0.0
    %342 = vmatprep.subr.mxu0 0.0
    %343 = vmatpush1.msra.mxu0 0.0
    %344 = vmatprep.subr.mxu0 0.0
    %345 = vmatpush1.msra.mxu0 0.0
    %346 = vmatprep.subr.mxu0 0.0
    %347 = vmatpush1.msra.mxu0 0.0
    %348 = vmatprep.subr.mxu0 0.0
    %349 = vmatpush1.msra.mxu0 0.0
    %350 = vmatprep.subr.mxu0 0.0
    %351 = vmatpush1.msra.mxu0 0.0
    %352 = vmatprep.subr.mxu0 0.0
    %353 = vmatpush1.msra.mxu0 0.0
    %354 = vmatprep.subr.mxu0 0.0
    %355 = vmatpush1.msra.mxu0 0.0
    %356 = vmatprep.subr.mxu0 0.0
    %357 = vmatpush1.msra.mxu0 0.0
    %358 = vmatprep.mubr.f32.mxu0 0.0
    %359 = vmatmul.mubr.f32.gmra.mrb[0].mxu0 %v292
    %v360 = vpop.f32.mrb[0].mxu0
    %v361 = vadd.f32 0.0, %v360
    %v362 = vpop.f32.mrb[0].mxu0
    %363 = vdwg.mxu0
    %365 = vset.pattern.permute.xlu0 0
    %366 = vperm.xlu0 %365, %v280
    %v367 = vpop.permute.xlu0 %366
    %v368 = vlaneseq
    %v369 = vshrl.u32 %v368, 7
    %v370 = vsub.s32 %v194, %v369
    %v371 = vrot.slane %v367, %v370
    %v372 = vsel %vm291, %v371, 0
    %374 = vmatprep.subr.mxu0 0.0
    %375 = vmatpush1.msra.mxu0 %v282
    %376 = vmatprep.subr.mxu0 0.0
    %377 = vmatpush1.msra.mxu0 0.0
    %378 = vmatprep.subr.mxu0 0.0
    %379 = vmatpush1.msra.mxu0 0.0
    %380 = vmatprep.subr.mxu0 0.0
    %381 = vmatpush1.msra.mxu0 0.0
    %382 = vmatprep.subr.mxu0 0.0
    %383 = vmatpush1.msra.mxu0 0.0
    %384 = vmatprep.subr.mxu0 0.0
    %385 = vmatpush1.msra.mxu0 0.0
    %386 = vmatprep.subr.mxu0 0.0
    %387 = vmatpush1.msra.mxu0 0.0
    %388 = vmatprep.subr.mxu0 0.0
    %389 = vmatpush1.msra.mxu0 0.0
    %390 = vmatprep.subr.mxu0 0.0
    %391 = vmatpush1.msra.mxu0 0.0
    %392 = vmatprep.subr.mxu0 0.0
    %393 = vmatpush1.msra.mxu0 0.0
    %394 = vmatprep.subr.mxu0 0.0
    %395 = vmatpush1.msra.mxu0 0.0
    %396 = vmatprep.subr.mxu0 0.0
    %397 = vmatpush1.msra.mxu0 0.0
    %398 = vmatprep.subr.mxu0 0.0
    %399 = vmatpush1.msra.mxu0 0.0
    %400 = vmatprep.subr.mxu0 0.0
    %401 = vmatpush1.msra.mxu0 0.0
    %402 = vmatprep.subr.mxu0 0.0
    %403 = vmatpush1.msra.mxu0 0.0
    %404 = vmatprep.subr.mxu0 0.0
    %405 = vmatpush1.msra.mxu0 0.0
    %406 = vmatprep.subr.mxu0 0.0
    %407 = vmatpush1.msra.mxu0 0.0
    %408 = vmatprep.subr.mxu0 0.0
    %409 = vmatpush1.msra.mxu0 0.0
    %410 = vmatprep.subr.mxu0 0.0
    %411 = vmatpush1.msra.mxu0 0.0
    %412 = vmatprep.subr.mxu0 0.0
    %413 = vmatpush1.msra.mxu0 0.0
    %414 = vmatprep.subr.mxu0 0.0
    %415 = vmatpush1.msra.mxu0 0.0
    %416 = vmatprep.subr.mxu0 0.0
    %417 = vmatpush1.msra.mxu0 0.0
    %418 = vmatprep.subr.mxu0 0.0
    %419 = vmatpush1.msra.mxu0 0.0
    %420 = vmatprep.subr.mxu0 0.0
    %421 = vmatpush1.msra.mxu0 0.0
    %422 = vmatprep.subr.mxu0 0.0
    %423 = vmatpush1.msra.mxu0 0.0
    %424 = vmatprep.subr.mxu0 0.0
    %425 = vmatpush1.msra.mxu0 0.0
    %426 = vmatprep.subr.mxu0 0.0
    %427 = vmatpush1.msra.mxu0 0.0
    %428 = vmatprep.subr.mxu0 0.0
    %429 = vmatpush1.msra.mxu0 0.0
    %430 = vmatprep.subr.mxu0 0.0
    %431 = vmatpush1.msra.mxu0 0.0
    %432 = vmatprep.subr.mxu0 0.0
    %433 = vmatpush1.msra.mxu0 0.0
    %434 = vmatprep.subr.mxu0 0.0
    %435 = vmatpush1.msra.mxu0 0.0
    %436 = vmatprep.subr.mxu0 0.0
    %437 = vmatpush1.msra.mxu0 0.0
    %438 = vmatprep.mubr.f32.mxu0 0.0
    %439 = vmatmul.mubr.f32.gmra.mrb[0].mxu0 %v372
    %v440 = vpop.f32.mrb[0].mxu0
    %v441 = vadd.f32 0.0, %v440
    %v442 = vpop.f32.mrb[0].mxu0
    %443 = vdwg.mxu0
    %v444 = vadd.f32 %v361, 0.0
    %v445 = vadd.f32 %v441, 0.0
    %vm446 = vcmask 1043459
    %v447 = vsel %vm446, %v371, %v290
    %v449 = vadd.f32 %v30, %v447
    %v452 = vrot.slane %v445, 7
    %v453 = vsel %vm203, %v452, %v444
    %vm455 = vcmask 517120
    %456 = vst.msk [vmem:[#allocation2] sm:$0x3] %vm455, %v453
    %v457 = vadd.s32 %v194, 4294967232
    %v458 = vlaneseq
    %v459 = vshrl.u32 %v458, 7
    %v460 = vsub.s32 %v457, %v459
    %v461 = vrot.slane %v286, %v460
    %v462 = vlaneseq
    %v463 = vshrl.u32 %v462, 7
    %v464 = vsub.s32 %v457, %v463
    %v465 = vrot.slane %v367, %v464
    %v466 = vsel %vm203, %v465, %v461
    %vm468 = vcmask 583168
    %469 = vst.msk [vmem:[#allocation2] sm:$0x3] %vm468, %v466
    %471 = vrot.lane.b32.xlu0 %v449, 72
    %v472 = vpop.permute.xlu0 %471
    %vm474 = vcmask 650818
    %475 = vst.msk [vmem:[#allocation2 - $0x2] sm:$0xc] %vm474, %v472
    // Predicated region
    $region22: #{tpu_custom_call.1} parent=1 // pred_check
      _
    $region23: #{tpu_custom_call.1} parent=1 // pred_check_branch
      %477 = sbr.rel (0) target = $region25
    $region24: #{tpu_custom_call.1} parent=1 // pred_region
      %s479 = ssub.s32 32, 32
      %480 = vsyncadd [#allocation3], %s479
      %s482 = sshll.u32 [#allocation2], 4
      %s483 = int_to_ptr.vmem [resolvable:$true] %s482
      %485 = dma.vmem_to_hbm [thread:$0]  %s483, 32, %s5, [#allocation3]
    $region25: #{tpu_custom_call.1} parent=1 // pred_fallthru
      _
    // Predicated region
    $region26: #{tpu_custom_call.1} parent=1 // pred_check
      _
    $region27: #{tpu_custom_call.1} parent=1 // pred_check_branch
      %487 = sbr.rel (0) target = $region29
    $region28: #{tpu_custom_call.1} parent=1 // pred_region
      %488 = dma.done [#allocation3], 32
    $region29: #{tpu_custom_call.1} parent=1 // pred_fallthru
      _
    %489 = vsyncpa [#allocation3], 1

</llo_original>
